<compile_context>
chip_gen: v7x
topology: tpu7x:2x2x1
jax: 0.10.0
libtpu: 0.0.40
codegen_flags: <defaults>
</compile_context>

<pallas_src>
import math
import functools

import jax
import jax.numpy as jnp
from jax.experimental import pallas as pl
from jax.experimental.pallas import tpu as pltpu


def _ama_kernel(w_ref, x_ref, o_ref, *, kernel_size, pad, valid_len):
    """Zero-padded 'same' Conv1d(1,1,k,bias=False) fused with out = x * y.

    w_ref : (k,)      conv weights in SMEM (scalar-prefetched once).
    x_ref : (TB, Lc)  input tile in VMEM.  Lc is either the logical conv
                      length L, or P*L when P logical rows are packed per
                      128-lane row.
    o_ref : (TB, Lc)  output tile in VMEM.
    """
    x = x_ref[...].astype(jnp.float32)                      # (TB, Lc)
    Lc = x.shape[-1]

    # Lane iota / validity masks live on a cheap (1, Lc) row (broadcast by the
    # multiply).  `pos` is the position inside the *logical* conv row, so conv
    # taps can never bleed across packed rows.
    lane = jax.lax.broadcasted_iota(jnp.int32, (1, Lc), dimension=1)
    pos = lane % valid_len

    y = jnp.zeros_like(x)
    # Tiny static tap loop (kernel_size is 3..7 for realistic channel counts).
    for j in range(kernel_size):
        off = j - pad                                       # y[i] += w[j] * x[i+off]
        if off == 0:
            shifted = x
        else:
            # Lane rotation on the XLU (free slot vs. the VPU); wraps inside
            # the block, which is safe because the lane axis is never tiled
            # and wrapped elements are zeroed by the masked weight row below.
            shifted = pltpu.roll(x, shift=(-off) % Lc, axis=1)
        valid = (pos + off >= 0) & (pos + off < valid_len)
        wm = jnp.where(valid, w_ref[j], 0.0)                # (1, Lc) masked weight row
        y = y + wm * shifted                                # 1 mul + 1 add per tap

    o_ref[...] = (x * y).astype(o_ref.dtype)


def _vmem_capacity_bytes():
    """Generation-aware VMEM capacity (v5e/v6e: 128 MiB, v7x: 64 MiB)."""
    try:
        return int(pltpu.get_tpu_info().vmem_capacity_bytes)
    except Exception:
        return 128 << 20


def _make_in_spec(block_shape, index_map, extra_buffering):
    if extra_buffering:
        try:
            return pl.BlockSpec(block_shape, index_map,
                                pipeline_mode=pl.Buffered(3))
        except TypeError:
            pass
    return pl.BlockSpec(block_shape, index_map)


def ama_forward(x, weight):
    """x: (B, 1, L), weight: (k,) float32 -> (B, 1, L) in x.dtype."""
    B, C, L = x.shape
    assert C == 1, "Conv1d has a single input channel"
    k = int(weight.shape[0])
    assert k % 2 == 1, "'same' conv requires odd kernel_size (make_ama_params guarantees it)"
    pad = (k - 1) // 2

    itemsize = jnp.dtype(x.dtype).itemsize
    sub = 16 if itemsize == 2 else 8                        # sublane tile multiple

    x2d = x.reshape(B, L)

    # ---- layout: no wrapper-side pad / slice (no extra HBM passes) ----------
    if L < 128 and (128 % L == 0) and B >= (128 // L) and (B % (128 // L) == 0):
        # Pack P = 128//L logical rows into one 128-lane row (free reshape of a
        # contiguous array) -> lane-dense loads/stores for small channel counts.
        P = 128 // L
        rows = B // P
        Lc = P * L
        x2d = x2d.reshape(rows, Lc)
    else:
        # Lane axis is the full array dim (legal block even if L % 128 != 0);
        # in-kernel masking handles validity.
        P = 1
        rows = B
        Lc = L

    bytes_per_row = Lc * itemsize

    # ---- tile sizing: largest tile that keeps the pipeline in VMEM ----------
    vmem_cap = _vmem_capacity_bytes()
    target_tile = (8 << 20) if vmem_cap >= (96 << 20) else (4 << 20)

    if rows <= sub:
        TB = rows                                           # full dim -> always legal
    else:
        TB = min(rows, max(sub, (target_tile // bytes_per_row) // sub * sub))
        # Guarantee >= 2 grid steps so the "parallel" axis can shard across
        # both v7x TensorCores (near-free on single-TC v5e/v6e).
        if pl.cdiv(rows, TB) < 2:
            TB = min(rows, max(sub, -(-((rows + 1) // 2) // sub) * sub))

    grid_steps = pl.cdiv(rows, TB)

    # ---- VMEM request: double-buffered I/O + in-kernel f32 temporaries ------
    tile_io = TB * Lc * itemsize
    tile_f32 = TB * Lc * 4
    need = 4 * tile_io + 4 * tile_f32 + (2 << 20)           # 2x(in+out) bufs + temps
    vmem_limit = int(min(vmem_cap * 3 // 4, max(32 << 20, need)))

    # Deeper buffering only helps when tiles are tiny and the grid is long.
    extra_buffering = (tile_io < (1 << 20)) and (grid_steps >= 4)

    kern = functools.partial(_ama_kernel, kernel_size=k, pad=pad, valid_len=L)

    out2d = pl.pallas_call(
        kern,
        out_shape=jax.ShapeDtypeStruct((rows, Lc), x.dtype),
        grid_spec=pltpu.PrefetchScalarGridSpec(
            num_scalar_prefetch=1,                          # weights -> SMEM, staged once
            grid=(grid_steps,),
            in_specs=[_make_in_spec((TB, Lc), lambda i, w: (i, 0), extra_buffering)],
            out_specs=pl.BlockSpec((TB, Lc), lambda i, w: (i, 0)),
        ),
        compiler_params=pltpu.CompilerParams(
            dimension_semantics=("parallel",),              # row tiles shard across TCs
            vmem_limit_bytes=vmem_limit,
        ),
    )(weight, x2d)

    # Contiguous reshape back to (B, 1, L) -- free, no data movement.
    return out2d.reshape(B, 1, L)


def make_ama_params(channel, key):
    """Deterministic Conv1d(1,1,k,bias=False) weight, PyTorch-style uniform init."""
    kernel_size = int(abs((2 * math.pow(channel, 0.35) + 1) / 4))
    kernel_size = kernel_size if kernel_size % 2 else kernel_size + 1
    fan_in = 1 * kernel_size
    bound = 1.0 / math.sqrt(fan_in)
    w = jax.random.uniform(key, (kernel_size,), jnp.float32, -bound, bound)
    return w, kernel_size


if __name__ == "__main__":
    key = jax.random.PRNGKey(0)
    kw, kx = jax.random.split(key)

    channel = 64                       # -> kernel_size = 3 (odd after adjustment)
    B, L = 2, channel                  # x: (batch, 1, channel-length)

    weight, kernel_size = make_ama_params(channel, kw)
    x = jax.random.normal(kx, (B, 1, L), jnp.float32)

    out = ama_forward(x, weight)
    jax.block_until_ready(out)
    assert out.shape == (B, 1, L)

    # Reference: zero-padded 'same' cross-correlation, then x * y.
    pad = (kernel_size - 1) // 2
    x2 = x[:, 0, :]
    xp = jnp.pad(x2, ((0, 0), (pad, pad)))
    ref_y = sum(weight[j] * xp[:, j:j + L] for j in range(kernel_size))
    ref = x2 * ref_y
    assert jnp.allclose(out[:, 0, :], ref, atol=1e-4, rtol=1e-4)

    # Also exercise the un-packed / full-extent-lane path (L not dividing 128,
    # rows split into >= 2 grid steps) to make sure the general layout works.
    B2, L2 = 32, 96
    x_b = jax.random.normal(jax.random.PRNGKey(1), (B2, 1, L2), jnp.float32)
    out_b = ama_forward(x_b, weight)
    jax.block_until_ready(out_b)
    x2_b = x_b[:, 0, :]
    xp_b = jnp.pad(x2_b, ((0, 0), (pad, pad)))
    ref_b = x2_b * sum(weight[j] * xp_b[:, j:j + L2] for j in range(kernel_size))
    assert jnp.allclose(out_b[:, 0, :], ref_b, atol=1e-4, rtol=1e-4)

    print("KERNEL_OK")
</pallas_src>

<mosaic_0001>
module attributes {stable_mosaic.version = 11 : i64} {
  func.func @_ama_kernel(%arg0: i32, %arg1: memref<3xf32, #tpu.memory_space<smem>>, %arg2: memref<1x128xf32, #tpu.memory_space<vmem>>, %arg3: memref<1x128xf32, #tpu.memory_space<vmem>>) attributes {dimension_semantics = [#tpu.dimension_semantics<parallel>], iteration_bounds = array<i64: 1>, scalar_prefetch = 1 : i64, scratch_operands = 0 : i64, tpu.core_type = #tpu.core_type<tc>, window_params = [{transform_indices = @transform_0, window_bounds = array<i64: 1, 128>}, {transform_indices = @transform_1, window_bounds = array<i64: 1, 128>}]} {
    %c0 = arith.constant 0 : index
    %c0_0 = arith.constant 0 : index
    %0 = vector.load %arg2[%c0, %c0_0] : memref<1x128xf32, #tpu.memory_space<vmem>>, vector<1x128xf32>
    %1 = tpu.iota {dimensions = array<i32: 1>} : vector<1x128xi32>
    %c64_i32 = arith.constant 64 : i32
    %c0_i32 = arith.constant 0 : i32
    %2 = arith.cmpi eq, %c64_i32, %c0_i32 : i32
    %c1_i32 = arith.constant 1 : i32
    %3 = arith.select %2, %c1_i32, %c64_i32 : i32
    %4 = vector.broadcast %3 : i32 to vector<1x128xi32>
    %5 = arith.remsi %1, %4 : vector<1x128xi32>
    %c0_i32_1 = arith.constant 0 : i32
    %6 = vector.broadcast %c0_i32_1 : i32 to vector<1x128xi32>
    %7 = arith.cmpi ne, %5, %6 : vector<1x128xi32>
    %c0_i32_2 = arith.constant 0 : i32
    %8 = vector.broadcast %c0_i32_2 : i32 to vector<1x128xi32>
    %9 = arith.cmpi slt, %5, %8 : vector<1x128xi32>
    %c0_i32_3 = arith.constant 0 : i32
    %10 = arith.cmpi slt, %3, %c0_i32_3 : i32
    %11 = vector.broadcast %10 : i1 to vector<1x128xi1>
    %12 = vector.broadcast %11 : vector<1x128xi1> to vector<1x128xi1>
    %13 = arith.xori %9, %12 : vector<1x128xi1>
    %14 = arith.andi %13, %7 : vector<1x128xi1>
    %15 = vector.broadcast %3 : i32 to vector<1x128xi32>
    %16 = arith.addi %5, %15 : vector<1x128xi32>
    %17 = arith.select %14, %16, %5 : vector<1x128xi1>, vector<1x128xi32>
    %cst = arith.constant 0.000000e+00 : f32
    %18 = vector.broadcast %cst : f32 to vector<1x128xf32>
    %c1_i32_4 = arith.constant 1 : i32
    %19 = tpu.dynamic_rotate %0 by %c1_i32_4 dim 1 : vector<1x128xf32>, i32 -> vector<1x128xf32>
    %c-1_i32 = arith.constant -1 : i32
    %20 = vector.broadcast %c-1_i32 : i32 to vector<1x128xi32>
    %21 = arith.addi %17, %20 : vector<1x128xi32>
    %c0_i32_5 = arith.constant 0 : i32
    %22 = vector.broadcast %c0_i32_5 : i32 to vector<1x128xi32>
    %23 = arith.cmpi sge, %21, %22 : vector<1x128xi32>
    %c-1_i32_6 = arith.constant -1 : i32
    %24 = vector.broadcast %c-1_i32_6 : i32 to vector<1x128xi32>
    %25 = arith.addi %17, %24 : vector<1x128xi32>
    %c64_i32_7 = arith.constant 64 : i32
    %26 = vector.broadcast %c64_i32_7 : i32 to vector<1x128xi32>
    %27 = arith.cmpi slt, %25, %26 : vector<1x128xi32>
    %28 = arith.andi %23, %27 : vector<1x128xi1>
    %c0_8 = arith.constant 0 : index
    %29 = memref.load %arg1[%c0_8] : memref<3xf32, #tpu.memory_space<smem>>
    %cst_9 = arith.constant 0.000000e+00 : f32
    %30 = vector.broadcast %29 : f32 to vector<1x128xf32>
    %31 = vector.broadcast %cst_9 : f32 to vector<1x128xf32>
    %32 = arith.select %28, %30, %31 : vector<1x128xi1>, vector<1x128xf32>
    %33 = arith.mulf %32, %19 : vector<1x128xf32>
    %34 = arith.addf %18, %33 : vector<1x128xf32>
    %c0_i32_10 = arith.constant 0 : i32
    %35 = vector.broadcast %c0_i32_10 : i32 to vector<1x128xi32>
    %36 = arith.addi %17, %35 : vector<1x128xi32>
    %c0_i32_11 = arith.constant 0 : i32
    %37 = vector.broadcast %c0_i32_11 : i32 to vector<1x128xi32>
    %38 = arith.cmpi sge, %36, %37 : vector<1x128xi32>
    %c0_i32_12 = arith.constant 0 : i32
    %39 = vector.broadcast %c0_i32_12 : i32 to vector<1x128xi32>
    %40 = arith.addi %17, %39 : vector<1x128xi32>
    %c64_i32_13 = arith.constant 64 : i32
    %41 = vector.broadcast %c64_i32_13 : i32 to vector<1x128xi32>
    %42 = arith.cmpi slt, %40, %41 : vector<1x128xi32>
    %43 = arith.andi %38, %42 : vector<1x128xi1>
    %c1 = arith.constant 1 : index
    %44 = memref.load %arg1[%c1] : memref<3xf32, #tpu.memory_space<smem>>
    %cst_14 = arith.constant 0.000000e+00 : f32
    %45 = vector.broadcast %44 : f32 to vector<1x128xf32>
    %46 = vector.broadcast %cst_14 : f32 to vector<1x128xf32>
    %47 = arith.select %43, %45, %46 : vector<1x128xi1>, vector<1x128xf32>
    %48 = arith.mulf %47, %0 : vector<1x128xf32>
    %49 = arith.addf %34, %48 : vector<1x128xf32>
    %c127_i32 = arith.constant 127 : i32
    %50 = tpu.dynamic_rotate %0 by %c127_i32 dim 1 : vector<1x128xf32>, i32 -> vector<1x128xf32>
    %c1_i32_15 = arith.constant 1 : i32
    %51 = vector.broadcast %c1_i32_15 : i32 to vector<1x128xi32>
    %52 = arith.addi %17, %51 : vector<1x128xi32>
    %c0_i32_16 = arith.constant 0 : i32
    %53 = vector.broadcast %c0_i32_16 : i32 to vector<1x128xi32>
    %54 = arith.cmpi sge, %52, %53 : vector<1x128xi32>
    %c1_i32_17 = arith.constant 1 : i32
    %55 = vector.broadcast %c1_i32_17 : i32 to vector<1x128xi32>
    %56 = arith.addi %17, %55 : vector<1x128xi32>
    %c64_i32_18 = arith.constant 64 : i32
    %57 = vector.broadcast %c64_i32_18 : i32 to vector<1x128xi32>
    %58 = arith.cmpi slt, %56, %57 : vector<1x128xi32>
    %59 = arith.andi %54, %58 : vector<1x128xi1>
    %c2 = arith.constant 2 : index
    %60 = memref.load %arg1[%c2] : memref<3xf32, #tpu.memory_space<smem>>
    %cst_19 = arith.constant 0.000000e+00 : f32
    %61 = vector.broadcast %60 : f32 to vector<1x128xf32>
    %62 = vector.broadcast %cst_19 : f32 to vector<1x128xf32>
    %63 = arith.select %59, %61, %62 : vector<1x128xi1>, vector<1x128xf32>
    %64 = arith.mulf %63, %50 : vector<1x128xf32>
    %65 = arith.addf %49, %64 : vector<1x128xf32>
    %66 = arith.mulf %0, %65 : vector<1x128xf32>
    %c0_20 = arith.constant 0 : index
    %c0_21 = arith.constant 0 : index
    %67 = vector.load %arg3[%c0_20, %c0_21] : memref<1x128xf32, #tpu.memory_space<vmem>>, vector<1x128xf32>
    tpu.vector_store %arg3[%c0_20, %c0_21], %66 {strides = array<i32>} : memref<1x128xf32, #tpu.memory_space<vmem>>, vector<1x128xf32>,
    return
  }
  func.func @transform_0(%arg0: i32, %arg1: memref<3xf32, #tpu.memory_space<smem>>) -> (i32, i32) {
    %c0_i32 = arith.constant 0 : i32
    %c0_i32_0 = arith.constant 0 : i32
    return %arg0, %c0_i32 : i32, i32
  }
  func.func @transform_1(%arg0: i32, %arg1: memref<3xf32, #tpu.memory_space<smem>>) -> (i32, i32) {
    %c0_i32 = arith.constant 0 : i32
    %c0_i32_0 = arith.constant 0 : i32
    return %arg0, %c0_i32 : i32, i32
  }
}

</mosaic_0001>

<llo_original>
// kernel: tpu_custom_call.1
$region0: #{tpu_custom_call.1}
  #allocation0 [shape = 'u32[]', space=smem, size = 0x4, offset = 0x4, fixed_abs, tag = 'smem constant byte address 0x4 - core index']
  #allocation1 [shape = 'u32[144,128]{1,0:T(1,128)}', space=vmem, size = 0x12000, scoped, tag = 'internal scratch']
  #allocation2 [shape = 's32[1]{0}', space=sflag, size = 0x4, scoped, tag = 'scoped memory for tpu_custom_call.1']
  #allocation3 [shape = 'u8[512]{0}', space=smem, size = 0x200, scoped, tag = 'prefetched SMEM operand 0']
  %s0 = inlined_call_operand.hbm [shape: f32[3], index: 0, kind: input, shape index: {}]
  %s1 = inlined_call_operand.vmem [shape: f32[1,128], index: 1, kind: input, shape index: {}]
  %s2 = inlined_call_operand.hbm [shape: f32[1,128], index: 2, kind: output, shape index: {}]
  %s3 = sld [smem:[#allocation0]]
  $region14: #{tpu_custom_call.1} parent=0
    _
  %s5 = ssub.s32 1, %s3
  %s6 = scalar_select 0, %s5, %s3
  %8 = dma.hbm_to_smem %s0, 16, [#allocation3], [#allocation2]
  %9 = dma.done [#allocation2], 16
  %10 = sfence
  $region1: #{tpu_custom_call.1} parent=0
    #allocation4 [shape = 'u8[512]{0}', space=vmem, size = 0x400, scoped, tag = 'output window, operand 0, single buffered']
    #allocation5 [shape = 's32[1]{0}', space=sflag, size = 0x4, scoped, tag = 'scoped memory for tpu_custom_call.1']
    %11 = vsyncpa [#allocation5], 0
    // Predicated region
    $region2: #{tpu_custom_call.1} parent=1 // pred_check
      _
    $region3: #{tpu_custom_call.1} parent=1 // pred_check_branch
      %13 = sbr.rel (0) target = $region5
    $region4: #{tpu_custom_call.1} parent=1 // pred_region
      _
    $region5: #{tpu_custom_call.1} parent=1 // pred_fallthru
      _
    %v14 = vld [vmem:[%s1] sm:$0x1]
    %v15 = vlaneseq
    %v16 = vand.u32 %v15, 127
    %vm17 = vcmp.lt.s32.totalorder %v16, 0
    %v18 = vsub.s32 0, %v16
    %v19 = vsel %vm17, %v18, %v16
    %v20 = vshrl.u32 %v19, 6
    %v21 = vand.u32 %v19, 63
    %v22 = vsub.s32 0, %v21
    %v23 = vsel %vm17, %v22, %v21
    %vm24 = vcmp.ne.s32.totalorder %v23, 0
    %vm25 = vcmp.lt.s32.totalorder %v23, 0
    %vm26 = vmand %vm25, %vm24
    %v27 = vadd.s32 %v23, 64
    %v28 = vsel %vm26, %v27, %v23
    %29 = vrot.lane.b32.xlu0 %v14, 1
    %v30 = vpop.permute.xlu0 %29
    %v31 = vadd.s32 %v28, 4294967295
    %vm32 = vcmp.ge.s32.totalorder %v31, 0
    %vm33 = vcmp.lt.s32.totalorder %v31, 64
    %vm34 = vmand %vm32, %vm33
    %s35 = sld [smem:[#allocation3]]
    %v36 = vstv %s35
    %v37 = vsel %vm34, %v36, 0.0
    %v38 = vmul.f32 %v37, %v30
    %v39 = vadd.f32 %v38, 0.0
    %vm40 = vcmp.ge.s32.totalorder %v28, 0
    %vm41 = vcmp.lt.s32.totalorder %v28, 64
    %vm42 = vmand %vm40, %vm41
    %s43 = sld [smem:[#allocation3 + $0x1]]
    %v44 = vstv %s43
    %v45 = vsel %vm42, %v44, 0.0
    %v46 = vmul.f32 %v45, %v14
    %v47 = vadd.f32 %v39, %v46
    %48 = vrot.lane.b32.xlu0 %v14, 127
    %v49 = vpop.permute.xlu0 %48
    %v50 = vadd.s32 %v28, 1
    %vm51 = vcmp.ge.s32.totalorder %v50, 0
    %vm52 = vcmp.lt.s32.totalorder %v50, 64
    %vm53 = vmand %vm51, %vm52
    %s54 = sld [smem:[#allocation3 + $0x2]]
    %v55 = vstv %s54
    %v56 = vsel %vm53, %v55, 0.0
    %v57 = vmul.f32 %v56, %v49
    %v58 = vadd.f32 %v47, %v57
    %v59 = vmul.f32 %v14, %v58
    %60 = vst [vmem:[#allocation4] sm:$0x1] %v59
    // Predicated region
    $region6: #{tpu_custom_call.1} parent=1 // pred_check
      _
    $region7: #{tpu_custom_call.1} parent=1 // pred_check_branch
      %62 = sbr.rel (0) target = $region9
    $region8: #{tpu_custom_call.1} parent=1 // pred_region
      %s64 = ssub.s32 16, 16
      %65 = vsyncadd [#allocation5], %s64
      %s67 = sshll.u32 [#allocation4], 4
      %s68 = int_to_ptr.vmem [resolvable:$true] %s67
      %70 = dma.vmem_to_hbm [thread:$0]  %s68, 16, %s2, [#allocation5]
    $region9: #{tpu_custom_call.1} parent=1 // pred_fallthru
      _
    // Predicated region
    $region10: #{tpu_custom_call.1} parent=1 // pred_check
      _
    $region11: #{tpu_custom_call.1} parent=1 // pred_check_branch
      %72 = sbr.rel (0) target = $region13
    $region12: #{tpu_custom_call.1} parent=1 // pred_region
      %73 = dma.done [#allocation5], 16
    $region13: #{tpu_custom_call.1} parent=1 // pred_fallthru
      _
    %74 = vsyncpa [#allocation5], 1

</llo_original>
